<compile_context>
chip_gen: v5e
topology: v5e:2x2
jax: 0.10.0
libtpu: 0.0.40
codegen_flags: <defaults>
</compile_context>

<pallas_src>
import functools

import jax
import jax.numpy as jnp
from jax.experimental import pallas as pl
from jax.experimental.pallas import tpu as pltpu

LANES = 128
SUBLANES = 8
TILE_ROWS_MAX = 8192                   # 4 MiB per f32 input tile
VMEM_LIMIT_BYTES = 32 * 1024 * 1024    # fits v5e/v6e (128 MiB phys) and v7x (64 MiB)


def _huber_partial_kernel(x_ref, y_ref, o_ref, *, delta, rows_total, tile_rows,
                          needs_mask):
    i = pl.program_id(0)
    # Upcast inside the kernel: inputs stream HBM->VMEM in their native dtype.
    x = x_ref[...].astype(jnp.float32)
    y = y_ref[...].astype(jnp.float32)
    d = x - y
    if needs_mask:
        # The last grid step over-reads rows past the real array; their
        # contents are undefined, so zero the diff there (Huber(0) == 0).
        row_ids = i * tile_rows + jax.lax.broadcasted_iota(
            jnp.int32, (tile_rows, LANES), 0)
        d = jnp.where(row_ids < rows_total, d, 0.0)
    ad = jnp.abs(d)
    # Branch-free folded Huber (no divide, no select); equal to the strict
    # |d| < delta form at the boundary, so it matches PyTorch exactly.
    q = jnp.minimum(ad, delta)
    per = 0.5 * q * q + delta * (ad - q)
    # Per-tile partial sum into a lane-dense (8,128) slab: pure VPU adds, no
    # carried state -> the grid axis stays fully parallel (v7x 2 TensorCores).
    o_ref[0] = per.reshape(-1, SUBLANES, LANES).sum(axis=0)


def huber_loss(x, x_hat, delta=1.0):
    assert x.shape == x_hat.shape, "x and x_hat must have the same shape"
    n = x.size
    xf = x.reshape(-1)
    yf = x_hat.reshape(-1)

    # Zero-copy when n is lane-aligned (reshape of a flat array is a bitcast).
    # Only the rare sub-128 tail forces a pad; padded zero pairs contribute 0.
    lane_pad = (-n) % LANES
    if lane_pad:
        xf = jnp.pad(xf, (0, lane_pad))
        yf = jnp.pad(yf, (0, lane_pad))
    rows_total = (n + lane_pad) // LANES

    # Row-tile granularity follows sublane packing: 8 for 32-bit, 16 for
    # 16-bit, 32 for 8-bit dtypes.
    itemsize = jnp.dtype(x.dtype).itemsize
    row_mult = max(SUBLANES, 32 // max(itemsize, 1))
    tile_rows = min(TILE_ROWS_MAX, pl.cdiv(rows_total, row_mult) * row_mult)
    num_tiles = pl.cdiv(rows_total, tile_rows)
    needs_mask = (rows_total % tile_rows) != 0   # last block over-reads rows

    x2 = xf.reshape(rows_total, LANES)
    y2 = yf.reshape(rows_total, LANES)

    kernel = functools.partial(
        _huber_partial_kernel,
        delta=float(delta),          # Python floats -> compile-time constants
        rows_total=rows_total,
        tile_rows=tile_rows,
        needs_mask=needs_mask,
    )

    partials = pl.pallas_call(
        kernel,
        out_shape=jax.ShapeDtypeStruct((num_tiles, SUBLANES, LANES), jnp.float32),
        grid_spec=pltpu.PrefetchScalarGridSpec(
            num_scalar_prefetch=0,
            grid=(num_tiles,),
            in_specs=[
                pl.BlockSpec((tile_rows, LANES), lambda i: (i, 0)),
                pl.BlockSpec((tile_rows, LANES), lambda i: (i, 0)),
            ],
            out_specs=pl.BlockSpec((1, SUBLANES, LANES), lambda i: (i, 0, 0)),
        ),
        compiler_params=pltpu.CompilerParams(
            dimension_semantics=("parallel",),
            vmem_limit_bytes=VMEM_LIMIT_BYTES,
        ),
        cost_estimate=pl.CostEstimate(
            flops=9 * n,
            transcendentals=0,
            bytes_accessed=2 * n * itemsize + num_tiles * SUBLANES * LANES * 4,
        ),
    )(x2, y2)

    # Tiny cross-tile reduce + mean scaling in the wrapper (keeps the grid
    # axis free of carried state; cost is num_tiles * 4 KiB, negligible).
    return jnp.sum(partials) * (1.0 / n)


def _ref_huber_loss(x, x_hat, delta=1.0):
    d = (x.astype(jnp.float32) - x_hat.astype(jnp.float32)) / delta
    ad = jnp.abs(d)
    per = jnp.where(ad < 1.0, 0.5 * d * d, ad - 0.5)
    return jnp.mean(per) * delta * delta


if __name__ == "__main__":
    key = jax.random.PRNGKey(0)
    k1, k2, k3, k4, k5, k6 = jax.random.split(key, 6)

    # Small NCHW-like inputs consistent with an image-reconstruction loss.
    x = jax.random.normal(k1, (2, 4, 16, 16), dtype=jnp.float32) * 2.0
    x_hat = jax.random.normal(k2, (2, 4, 16, 16), dtype=jnp.float32) * 2.0
    out = jax.block_until_ready(huber_loss(x, x_hat, delta=1.0))
    ref = _ref_huber_loss(x, x_hat, delta=1.0)
    assert jnp.allclose(out, ref, rtol=1e-5, atol=1e-6), (out, ref)

    # Non-aligned shape + delta != 1: exercises the in-kernel row-mask path.
    a = jax.random.normal(k3, (3, 5, 7), dtype=jnp.float32) * 3.0
    b = jax.random.normal(k4, (3, 5, 7), dtype=jnp.float32) * 3.0
    out2 = jax.block_until_ready(huber_loss(a, b, delta=2.0))
    ref2 = _ref_huber_loss(a, b, delta=2.0)
    assert jnp.allclose(out2, ref2, rtol=1e-5, atol=1e-6), (out2, ref2)

    # bf16 inputs: streamed at 2 B/elem and upcast inside the kernel.
    c = jax.random.normal(k5, (2, 4, 16, 16), dtype=jnp.float32).astype(jnp.bfloat16)
    e = jax.random.normal(k6, (2, 4, 16, 16), dtype=jnp.float32).astype(jnp.bfloat16)
    out3 = jax.block_until_ready(huber_loss(c, e, delta=1.0))
    ref3 = _ref_huber_loss(c.astype(jnp.float32), e.astype(jnp.float32), delta=1.0)
    assert jnp.allclose(out3, ref3, rtol=1e-5, atol=1e-6), (out3, ref3)

    print("KERNEL_OK")
</pallas_src>

<mosaic_0001>
module attributes {stable_mosaic.version = 11 : i64} {
  func.func @_huber_partial_kernel(%arg0: i32, %arg1: memref<16x128xf32, #tpu.memory_space<vmem>>, %arg2: memref<16x128xf32, #tpu.memory_space<vmem>>, %arg3: memref<1x8x128xf32, #tpu.memory_space<vmem>>) attributes {dimension_semantics = [#tpu.dimension_semantics<parallel>], iteration_bounds = array<i64: 1>, scalar_prefetch = 0 : i64, scratch_operands = 0 : i64, tpu.core_type = #tpu.core_type<tc>, window_params = [{transform_indices = @transform_0, window_bounds = array<i64: 16, 128>}, {transform_indices = @transform_1, window_bounds = array<i64: 16, 128>}, {transform_indices = @transform_2, window_bounds = array<i64: 1, 8, 128>}]} {
    %c0 = arith.constant 0 : index
    %c0_0 = arith.constant 0 : index
    %0 = vector.load %arg1[%c0, %c0_0] : memref<16x128xf32, #tpu.memory_space<vmem>>, vector<16x128xf32>
    %c0_1 = arith.constant 0 : index
    %c0_2 = arith.constant 0 : index
    %1 = vector.load %arg2[%c0_1, %c0_2] : memref<16x128xf32, #tpu.memory_space<vmem>>, vector<16x128xf32>
    %2 = arith.subf %0, %1 : vector<16x128xf32>
    %3 = math.absf %2 : vector<16x128xf32>
    %cst = arith.constant 1.000000e+00 : f32
    %4 = vector.broadcast %cst : f32 to vector<16x128xf32>
    %5 = arith.minimumf %3, %4 : vector<16x128xf32>
    %cst_3 = arith.constant 5.000000e-01 : f32
    %6 = vector.broadcast %cst_3 : f32 to vector<16x128xf32>
    %7 = arith.mulf %6, %5 : vector<16x128xf32>
    %8 = arith.mulf %7, %5 : vector<16x128xf32>
    %9 = arith.subf %3, %5 : vector<16x128xf32>
    %cst_4 = arith.constant 1.000000e+00 : f32
    %10 = vector.broadcast %cst_4 : f32 to vector<16x128xf32>
    %11 = arith.mulf %10, %9 : vector<16x128xf32>
    %12 = arith.addf %8, %11 : vector<16x128xf32>
    %13 = vector.shape_cast %12 : vector<16x128xf32> to vector<2x8x128xf32>
    %cst_5 = arith.constant dense<0.000000e+00> : vector<8x128xf32>
    %14 = vector.multi_reduction <add>, %13, %cst_5 [0] : vector<2x8x128xf32> to vector<8x128xf32>
    %c0_6 = arith.constant 0 : index
    %c0_7 = arith.constant 0 : index
    %c0_8 = arith.constant 0 : index
    %15 = vector.load %arg3[%c0_6, %c0_7, %c0_8] : memref<1x8x128xf32, #tpu.memory_space<vmem>>, vector<1x8x128xf32>
    %16 = vector.shape_cast %15 : vector<1x8x128xf32> to vector<8x128xf32>
    %17 = vector.shape_cast %14 : vector<8x128xf32> to vector<1x8x128xf32>
    tpu.vector_store %arg3[%c0_6, %c0_7, %c0_8], %17 {strides = array<i32>} : memref<1x8x128xf32, #tpu.memory_space<vmem>>, vector<1x8x128xf32>,
    return
  }
  func.func @transform_0(%arg0: i32) -> (i32, i32) {
    %c0_i32 = arith.constant 0 : i32
    %c0_i32_0 = arith.constant 0 : i32
    return %arg0, %c0_i32 : i32, i32
  }
  func.func @transform_1(%arg0: i32) -> (i32, i32) {
    %c0_i32 = arith.constant 0 : i32
    %c0_i32_0 = arith.constant 0 : i32
    return %arg0, %c0_i32 : i32, i32
  }
  func.func @transform_2(%arg0: i32) -> (i32, i32, i32) {
    %c0_i32 = arith.constant 0 : i32
    %c0_i32_0 = arith.constant 0 : i32
    %c0_i32_1 = arith.constant 0 : i32
    return %arg0, %c0_i32, %c0_i32_0 : i32, i32, i32
  }
}

</mosaic_0001>

<llo_original>
// kernel: tpu_custom_call.1
$region0: #{tpu_custom_call.1}
  #allocation0 [shape = 'u32[]', space=smem, size = 0x4, offset = 0x4, fixed_abs, tag = 'smem constant byte address 0x4 - core index']
  #allocation1 [shape = 'u32[72,128]{1,0:T(1,128)}', space=vmem, size = 0x9000, scoped, tag = 'internal scratch']
  %s0 = inlined_call_operand.hbm [shape: f32[16,128], index: 0, kind: input, shape index: {}]
  %s1 = inlined_call_operand.hbm [shape: f32[16,128], index: 1, kind: input, shape index: {}]
  %s2 = inlined_call_operand.hbm [shape: f32[1,8,128], index: 2, kind: output, shape index: {}]
  %s3 = sld [smem:[#allocation0]]
  $region26: #{tpu_custom_call.1} parent=0
    _
  %s5 = ssub.s32 1, %s3
  %s6 = scalar_select 0, %s5, %s3
  $region1: #{tpu_custom_call.1} parent=0
    #allocation2 [shape = 'u8[8192]{0}', space=vmem, size = 0x2000, scoped, tag = 'input window, operand 0, single buffered']
    #allocation3 [shape = 's32[1]{0}', space=sflag, size = 0x4, scoped, tag = 'scoped memory for tpu_custom_call.1']
    #allocation4 [shape = 's32[1]{0}', space=sflag, size = 0x4, scoped, tag = 'scoped memory for tpu_custom_call.1']
    #allocation5 [shape = 'u8[8192]{0}', space=vmem, size = 0x2000, scoped, tag = 'input window, operand 1, single buffered']
    #allocation6 [shape = 's32[1]{0}', space=sflag, size = 0x4, scoped, tag = 'scoped memory for tpu_custom_call.1']
    #allocation7 [shape = 'u8[4096]{0}', space=vmem, size = 0x1000, scoped, tag = 'output window, operand 0, single buffered']
    %7 = vsyncpa [#allocation3], 0
    %8 = vsyncpa [#allocation6], 0
    %9 = vsyncpa [#allocation4], 0
    // Predicated region
    $region2: #{tpu_custom_call.1} parent=1 // pred_check
      _
    $region3: #{tpu_custom_call.1} parent=1 // pred_check_branch
      %11 = sbr.rel (0) target = $region5
    $region4: #{tpu_custom_call.1} parent=1 // pred_region
      %13 = vsyncadd [#allocation3], 0
      %s14 = sshll.u32 %s0, 4
      %s15 = int_to_ptr.hbm [resolvable:$true] %s14
      %s16 = sshll.u32 [#allocation2], 4
      %s17 = int_to_ptr.vmem [resolvable:$true] %s16
      %22 = dma.hbm_to_vmem [thread:$0]  %s15, 256, %s17, [#allocation3], 128, 128, 8
    $region5: #{tpu_custom_call.1} parent=1 // pred_fallthru
      _
    // Predicated region
    $region6: #{tpu_custom_call.1} parent=1 // pred_check
      _
    $region7: #{tpu_custom_call.1} parent=1 // pred_check_branch
      %24 = sbr.rel (0) target = $region9
    $region8: #{tpu_custom_call.1} parent=1 // pred_region
      %26 = vsyncadd [#allocation6], 0
      %s27 = sshll.u32 %s1, 4
      %s28 = int_to_ptr.hbm [resolvable:$true] %s27
      %s29 = sshll.u32 [#allocation5], 4
      %s30 = int_to_ptr.vmem [resolvable:$true] %s29
      %35 = dma.hbm_to_vmem [thread:$0]  %s28, 256, %s30, [#allocation6], 128, 128, 8
    $region9: #{tpu_custom_call.1} parent=1 // pred_fallthru
      _
    // Predicated region
    $region10: #{tpu_custom_call.1} parent=1 // pred_check
      _
    $region11: #{tpu_custom_call.1} parent=1 // pred_check_branch
      %37 = sbr.rel (0) target = $region13
    $region12: #{tpu_custom_call.1} parent=1 // pred_region
      %39 = dma.done [#allocation3], 256
    $region13: #{tpu_custom_call.1} parent=1 // pred_fallthru
      _
    // Predicated region
    $region14: #{tpu_custom_call.1} parent=1 // pred_check
      _
    $region15: #{tpu_custom_call.1} parent=1 // pred_check_branch
      %41 = sbr.rel (0) target = $region17
    $region16: #{tpu_custom_call.1} parent=1 // pred_region
      %43 = dma.done [#allocation6], 256
    $region17: #{tpu_custom_call.1} parent=1 // pred_fallthru
      _
    %v44 = vld [vmem:[#allocation2] sm:$0xff]
    %v45 = vld [vmem:[#allocation2 + $0x8] sm:$0xff]
    %v46 = vld [vmem:[#allocation5] sm:$0xff]
    %v47 = vld [vmem:[#allocation5 + $0x8] sm:$0xff]
    %v48 = vsub.f32 %v44, %v46
    %v49 = vsub.f32 %v45, %v47
    %v50 = vand.u32 2147483647, %v48
    %v51 = vand.u32 2147483647, %v49
    %v52 = vmin.f32 %v50, 1.0
    %v53 = vmin.f32 %v51, 1.0
    %v54 = vmul.f32 %v52, 0.5
    %v55 = vmul.f32 %v53, 0.5
    %v56 = vmul.f32 %v54, %v52
    %v57 = vmul.f32 %v55, %v53
    %v58 = vsub.f32 %v50, %v52
    %v59 = vsub.f32 %v51, %v53
    %v60 = vadd.f32 %v56, %v58
    %v61 = vadd.f32 %v57, %v59
    %v62 = vadd.f32 %v60, %v61
    %63 = vst [vmem:[#allocation7] sm:$0xff] %v62
    // Predicated region
    $region18: #{tpu_custom_call.1} parent=1 // pred_check
      _
    $region19: #{tpu_custom_call.1} parent=1 // pred_check_branch
      %65 = sbr.rel (0) target = $region21
    $region20: #{tpu_custom_call.1} parent=1 // pred_region
      %67 = vsyncadd [#allocation4], 0
      %s69 = sshll.u32 [#allocation7], 4
      %s70 = int_to_ptr.vmem [resolvable:$true] %s69
      %s71 = sshll.u32 %s2, 4
      %s72 = int_to_ptr.hbm [resolvable:$true] %s71
      %74 = dma.vmem_to_hbm [thread:$0]  %s70, 128, %s72, [#allocation4]
    $region21: #{tpu_custom_call.1} parent=1 // pred_fallthru
      _
    // Predicated region
    $region22: #{tpu_custom_call.1} parent=1 // pred_check
      _
    $region23: #{tpu_custom_call.1} parent=1 // pred_check_branch
      %76 = sbr.rel (0) target = $region25
    $region24: #{tpu_custom_call.1} parent=1 // pred_region
      %78 = dma.done [#allocation4], 128
    $region25: #{tpu_custom_call.1} parent=1 // pred_fallthru
      _
    %79 = vsyncpa [#allocation3], 1
    %80 = vsyncpa [#allocation6], 1
    %81 = vsyncpa [#allocation4], 1

</llo_original>
